<compile_context>
chip_gen: v6e
topology: v6e:2x2x1
jax: 0.10.0
libtpu: 0.0.40
codegen_flags: <defaults>
</compile_context>

<pallas_src>
import functools
import math

import jax
import jax.numpy as jnp
from jax.experimental import pallas as pl
from jax.experimental.pallas import tpu as pltpu

_BN_EPS = 1e-5          # torch.nn.BatchNorm1d default
_MIB = 1 << 20
_LANE = 128

_FUSED_VMEM_BUDGET = 20 * _MIB   # whole-projector fused path budget (v7x-safe)
_X_RESIDENT_BYTES = 4 * _MIB     # keep x resident in VMEM below this size


# ---------------------------------------------------------------------------
# small helpers
# ---------------------------------------------------------------------------
def _pad_axis(a, axis, multiple):
    size = a.shape[axis]
    pad = (-size) % multiple
    if pad == 0:
        return a
    widths = [(0, 0)] * a.ndim
    widths[axis] = (0, pad)
    return jnp.pad(a, widths)


def _pick_tile(dim, cap, quantum=_LANE):
    """Largest tile <= cap that is a multiple of `quantum` and divides dim.

    `dim` is assumed to already be a multiple of `quantum` when dim > cap
    (we pad to 128 first), so a divisor always exists; otherwise fall back to
    the full dim (no tiling)."""
    if dim <= cap:
        return dim
    t = (cap // quantum) * quantum
    while t >= quantum:
        if dim % t == 0:
            return t
        t -= quantum
    return dim


def _vmem_limit(est_bytes):
    limit = int(est_bytes * 1.5) + 2 * _MIB
    return int(min(max(limit, 16 * _MIB), 48 * _MIB))


# ---------------------------------------------------------------------------
# Kernel A: whole projector fused into a single pallas_call (small heads)
# ---------------------------------------------------------------------------
def _fused_projector_kernel(*refs, num_hidden, eps):
    x_ref = refs[0]
    o_ref = refs[-1]
    layer_refs = refs[1:-1]

    h = x_ref[...]
    idx = 0
    for _ in range(num_hidden):
        w_ref = layer_refs[idx]
        g_ref = layer_refs[idx + 1]
        b_ref = layer_refs[idx + 2]
        idx += 3
        y = jnp.dot(h.astype(w_ref.dtype), w_ref[...],
                    preferred_element_type=jnp.float32)
        inv_n = 1.0 / y.shape[0]
        mean = jnp.sum(y, axis=0, keepdims=True) * inv_n
        ex2 = jnp.sum(y * y, axis=0, keepdims=True) * inv_n
        var = jnp.maximum(ex2 - mean * mean, 0.0)           # biased (train mode)
        y_hat = (y - mean) * jax.lax.rsqrt(var + eps)
        h = jnp.maximum(y_hat * g_ref[...].astype(jnp.float32)
                        + b_ref[...].astype(jnp.float32), 0.0)

    w_ref = layer_refs[idx]
    o_ref[...] = jnp.dot(h.astype(w_ref.dtype), w_ref[...],
                         preferred_element_type=jnp.float32).astype(o_ref.dtype)


def _fused_footprint(x, hidden, final_w):
    B = x.shape[0]
    widths = [x.shape[1]] + [w.shape[1] for (w, _, _) in hidden] + [final_w.shape[1]]
    bytes_ = x.size * x.dtype.itemsize
    for (w, g, b) in hidden:
        bytes_ += w.size * w.dtype.itemsize + (g.size + b.size) * 4
    bytes_ += final_w.size * final_w.dtype.itemsize
    bytes_ += 4 * B * max(widths) * 4          # a few f32 (B, widest) temporaries
    return bytes_


def fused_projector(x, hidden, final_w, *, eps=_BN_EPS):
    B = x.shape[0]
    n_out = final_w.shape[1]
    inputs = [x]
    for (w, gamma, beta) in hidden:
        inputs += [w, gamma.reshape(1, -1), beta.reshape(1, -1)]
    inputs.append(final_w)

    est = _fused_footprint(x, hidden, final_w)
    kernel = functools.partial(_fused_projector_kernel,
                               num_hidden=len(hidden), eps=eps)
    return pl.pallas_call(
        kernel,
        out_shape=jax.ShapeDtypeStruct((B, n_out), x.dtype),
        compiler_params=pltpu.CompilerParams(vmem_limit_bytes=_vmem_limit(est)),
    )(*inputs)


# ---------------------------------------------------------------------------
# Kernel B: fused Linear + BatchNorm1d(batch stats) + ReLU  (tiled path)
# ---------------------------------------------------------------------------
def _linear_bn_relu_kernel(x_ref, w_ref, g_ref, b_ref, o_ref, acc_ref, *,
                           eps, tk, x_full_k):
    k = pl.program_id(1)

    @pl.when(k == 0)
    def _():
        acc_ref[...] = jnp.zeros_like(acc_ref)

    if x_full_k:                       # x is resident with full K: slice it
        start = pl.multiple_of(k * tk, _LANE)
        xk = x_ref[:, pl.ds(start, tk)]
    else:
        xk = x_ref[...]
    acc_ref[...] += jnp.dot(xk.astype(w_ref.dtype), w_ref[...],
                            preferred_element_type=jnp.float32)

    @pl.when(k == pl.num_programs(1) - 1)
    def _():
        y = acc_ref[...]
        inv_n = 1.0 / y.shape[0]
        mean = jnp.sum(y, axis=0, keepdims=True) * inv_n          # one pass:
        ex2 = jnp.sum(y * y, axis=0, keepdims=True) * inv_n       # sum + sumsq
        var = jnp.maximum(ex2 - mean * mean, 0.0)
        y_hat = (y - mean) * jax.lax.rsqrt(var + eps)
        out = (y_hat * g_ref[...].astype(jnp.float32)
               + b_ref[...].astype(jnp.float32))
        o_ref[...] = jnp.maximum(out, 0.0).astype(o_ref.dtype)


def linear_bn_relu(x, w, gamma, beta, *, eps=_BN_EPS, out_dtype=None,
                   tn_cap=1024, tk_cap=1024):
    """y = relu(batchnorm_train(x @ w))  — the Linear bias is omitted because
    the BN mean subtraction cancels it exactly."""
    B, K = x.shape
    Kw, N = w.shape
    assert K == Kw
    out_dtype = out_dtype or x.dtype

    # Pad K/N up to multiples of 128; padded columns produce zeros and are
    # sliced away (zero K-padding contributes nothing to the dot).
    xp = _pad_axis(x, 1, _LANE)
    wp = _pad_axis(_pad_axis(w, 0, _LANE), 1, _LANE)
    gp = _pad_axis(gamma.reshape(1, -1).astype(jnp.float32), 1, _LANE)
    bp = _pad_axis(beta.reshape(1, -1).astype(jnp.float32), 1, _LANE)
    Kp, Np = wp.shape

    # Keep the O(B * tn) activation/accumulator footprint bounded (the batch is
    # never grid-tiled here: BN batch stats need the whole batch per N tile).
    tn_cap_eff = min(tn_cap, max(_LANE, ((8 * _MIB) // (4 * B) // _LANE) * _LANE))
    tn = _pick_tile(Np, tn_cap_eff)
    tk = _pick_tile(Kp, tk_cap)

    x_bytes = xp.size * xp.dtype.itemsize
    x_full_k = x_bytes <= _X_RESIDENT_BYTES
    if x_full_k:
        x_spec = pl.BlockSpec((B, Kp), lambda j, k: (0, 0))   # DMA once, resident
        est_x = x_bytes
    else:
        x_spec = pl.BlockSpec((B, tk), lambda j, k: (0, k))
        est_x = 2 * B * tk * xp.dtype.itemsize

    est = (2 * tk * tn * wp.dtype.itemsize + est_x
           + 2 * B * tn * jnp.dtype(out_dtype).itemsize
           + B * tn * 4 + 8 * tn * 4)

    kernel = functools.partial(_linear_bn_relu_kernel, eps=eps, tk=tk,
                               x_full_k=x_full_k)
    out = pl.pallas_call(
        kernel,
        out_shape=jax.ShapeDtypeStruct((B, Np), out_dtype),
        grid_spec=pltpu.PrefetchScalarGridSpec(
            num_scalar_prefetch=0,
            grid=(Np // tn, Kp // tk),
            in_specs=[
                x_spec,
                pl.BlockSpec((tk, tn), lambda j, k: (k, j)),
                pl.BlockSpec((1, tn), lambda j, k: (0, j)),
                pl.BlockSpec((1, tn), lambda j, k: (0, j)),
            ],
            out_specs=pl.BlockSpec((B, tn), lambda j, k: (0, j)),
            scratch_shapes=[pltpu.VMEM((B, tn), jnp.float32)],
        ),
        compiler_params=pltpu.CompilerParams(
            dimension_semantics=("parallel", "arbitrary"),
            vmem_limit_bytes=_vmem_limit(est)),
    )(xp, wp, gp, bp)
    return out[:, :N] if Np != N else out


# ---------------------------------------------------------------------------
# Kernel C: final Linear without bias (tiled path)
# ---------------------------------------------------------------------------
def _linear_nobias_kernel(x_ref, w_ref, o_ref, acc_ref, *, tk, x_full_k):
    k = pl.program_id(2)

    @pl.when(k == 0)
    def _():
        acc_ref[...] = jnp.zeros_like(acc_ref)

    if x_full_k:
        start = pl.multiple_of(k * tk, _LANE)
        xk = x_ref[:, pl.ds(start, tk)]
    else:
        xk = x_ref[...]
    acc_ref[...] += jnp.dot(xk.astype(w_ref.dtype), w_ref[...],
                            preferred_element_type=jnp.float32)

    @pl.when(k == pl.num_programs(2) - 1)
    def _():
        o_ref[...] = acc_ref[...].astype(o_ref.dtype)


def linear_nobias(x, w, *, out_dtype=None, tn_cap=1024, tk_cap=1024):
    """y = x @ w  — tiled Pallas matmul (bias-free final projection)."""
    B, K = x.shape
    Kw, N = w.shape
    assert K == Kw
    out_dtype = out_dtype or x.dtype

    xp = _pad_axis(x, 1, _LANE)
    wp = _pad_axis(_pad_axis(w, 0, _LANE), 1, _LANE)
    Kp, Np = wp.shape

    tn = _pick_tile(Np, tn_cap)
    tk = _pick_tile(Kp, tk_cap)

    # Tile the batch when it is large: bounds VMEM and gives v7x's two
    # TensorCores a parallel axis even when N fits in a single tile.
    tb = _pick_tile(B, 512, quantum=16) if B >= 256 else B

    x_bytes = xp.size * xp.dtype.itemsize
    x_full_k = (tb == B) and (x_bytes <= _X_RESIDENT_BYTES)
    if x_full_k:
        x_spec = pl.BlockSpec((B, Kp), lambda b, j, k: (0, 0))
        est_x = x_bytes
    else:
        x_spec = pl.BlockSpec((tb, tk), lambda b, j, k: (b, k))
        est_x = 2 * tb * tk * xp.dtype.itemsize

    est = (2 * tk * tn * wp.dtype.itemsize + est_x
           + 2 * tb * tn * jnp.dtype(out_dtype).itemsize + tb * tn * 4)

    kernel = functools.partial(_linear_nobias_kernel, tk=tk, x_full_k=x_full_k)
    out = pl.pallas_call(
        kernel,
        out_shape=jax.ShapeDtypeStruct((B, Np), out_dtype),
        grid_spec=pltpu.PrefetchScalarGridSpec(
            num_scalar_prefetch=0,
            grid=(B // tb, Np // tn, Kp // tk),
            in_specs=[
                x_spec,
                pl.BlockSpec((tk, tn), lambda b, j, k: (k, j)),
            ],
            out_specs=pl.BlockSpec((tb, tn), lambda b, j, k: (b, j)),
            scratch_shapes=[pltpu.VMEM((tb, tn), jnp.float32)],
        ),
        compiler_params=pltpu.CompilerParams(
            dimension_semantics=("parallel", "parallel", "arbitrary"),
            vmem_limit_bytes=_vmem_limit(est)),
    )(xp, wp)
    return out[:, :N] if Np != N else out


# ---------------------------------------------------------------------------
# Projector module (mirrors the PyTorch spec, forward pass only)
# ---------------------------------------------------------------------------
class Projector:
    """JAX/Pallas port of the PyTorch Projector.

    Hidden Linear biases are not materialized: a fresh BatchNorm1d in training
    mode subtracts the batch mean right after the Linear, which cancels any
    bias exactly, so omitting it leaves the forward pass unchanged while
    removing a dead DMA stream.  `random=True` only affects requires_grad in
    torch (no forward effect).  `stream_dtype=jnp.bfloat16` streams weights
    and hidden activations in bf16 (f32 MXU accumulation kept)."""

    def __init__(self, arch: str, embedding: int, random: bool = False, *,
                 key=None, dtype=jnp.float32, stream_dtype=None,
                 use_fused=None):
        self.arch = arch
        self.embedding = embedding
        self.random = random
        self.use_fused = use_fused
        self.stream_dtype = stream_dtype
        if arch == 'id':
            self.params = None
            self.output_dim = embedding
            return

        dims = [embedding] + list(map(int, arch.split('-')))
        self.output_dim = dims[-1]
        if key is None:
            key = jax.random.PRNGKey(0)
        pdtype = stream_dtype or dtype

        hidden = []
        for i in range(len(dims) - 2):
            fan_in, fan_out = dims[i], dims[i + 1]
            bound = 1.0 / math.sqrt(fan_in)
            key, kw = jax.random.split(key)
            w = jax.random.uniform(kw, (fan_in, fan_out), jnp.float32,
                                   -bound, bound).astype(pdtype)
            gamma = jnp.ones((fan_out,), jnp.float32)    # fresh BatchNorm1d weight
            beta = jnp.zeros((fan_out,), jnp.float32)    # fresh BatchNorm1d bias
            hidden.append((w, gamma, beta))

        fan_in, fan_out = dims[-2], dims[-1]
        bound = 1.0 / math.sqrt(fan_in)
        key, kw = jax.random.split(key)
        w_final = jax.random.uniform(kw, (fan_in, fan_out), jnp.float32,
                                     -bound, bound).astype(pdtype)
        self.params = {'hidden': hidden, 'final_w': w_final}

    def __call__(self, x):
        if self.params is None:          # arch == 'id'
            return x
        hidden = self.params['hidden']
        final_w = self.params['final_w']

        use_fused = self.use_fused
        if use_fused is None:
            use_fused = _fused_footprint(x, hidden, final_w) <= _FUSED_VMEM_BUDGET
        if use_fused:
            return fused_projector(x, hidden, final_w)

        h = x
        hdtype = self.stream_dtype or x.dtype
        for (w, gamma, beta) in hidden:
            h = linear_bn_relu(h, w, gamma, beta, out_dtype=hdtype)
        return linear_nobias(h, final_w, out_dtype=x.dtype)


# ---------------------------------------------------------------------------
# Pure-JAX reference with identical semantics (training-mode BatchNorm1d)
# ---------------------------------------------------------------------------
def projector_ref(params, x, eps=_BN_EPS):
    if params is None:
        return x
    h = x.astype(jnp.float32)
    for (w, gamma, beta) in params['hidden']:
        y = h @ w.astype(jnp.float32)
        mean = jnp.mean(y, axis=0, keepdims=True)
        var = jnp.mean(jnp.square(y - mean), axis=0, keepdims=True)
        h = jnp.maximum((y - mean) / jnp.sqrt(var + eps) * gamma + beta, 0.0)
    return h @ params['final_w'].astype(jnp.float32)


if __name__ == "__main__":
    key = jax.random.PRNGKey(0)
    k_x, k_p1, k_x2, k_p2 = jax.random.split(key, 4)

    # 1) Small head -> single fused pallas_call path.
    batch, embedding = 8, 32
    arch = "64-32"          # Linear(32,64)+BN+ReLU, Linear(64,32, no bias)
    x = jax.random.normal(k_x, (batch, embedding), dtype=jnp.float32)
    proj = Projector(arch, embedding, key=k_p1)
    out = jax.block_until_ready(proj(x))
    assert out.shape == (batch, proj.output_dim)
    ref = projector_ref(proj.params, x)
    assert jnp.allclose(out, ref, atol=1e-4, rtol=1e-4), "fused path mismatch"

    # 2) Force the tiled per-layer path (exercises 128-padding, resident-x
    #    BlockSpec and the K-reduction grid) on non-multiple-of-128 dims.
    batch2, emb2 = 16, 160
    arch2 = "200-96"
    x2 = jax.random.normal(k_x2, (batch2, emb2), dtype=jnp.float32)
    proj2 = Projector(arch2, emb2, key=k_p2, use_fused=False)
    out2 = jax.block_until_ready(proj2(x2))
    assert out2.shape == (batch2, proj2.output_dim)
    ref2 = projector_ref(proj2.params, x2)
    assert jnp.allclose(out2, ref2, atol=1e-3, rtol=1e-3), "tiled path mismatch"

    # 3) Identity architecture.
    proj_id = Projector("id", embedding)
    assert jnp.array_equal(jax.block_until_ready(proj_id(x)), x)

    # 4) bf16 weight/activation streaming (HBM-bandwidth optimization) —
    #    compile/run coverage; accuracy is bounded by bf16 rounding.
    proj_bf = Projector(arch, embedding, key=k_p1, stream_dtype=jnp.bfloat16)
    out_bf = jax.block_until_ready(proj_bf(x))
    assert out_bf.shape == (batch, proj_bf.output_dim)

    print("KERNEL_OK")
</pallas_src>

<mosaic_0001>
module attributes {stable_mosaic.version = 11 : i64} {
  func.func @_fused_projector_kernel(%arg0: memref<8x32xf32, #tpu.memory_space<vmem>>, %arg1: memref<32x64xf32, #tpu.memory_space<vmem>>, %arg2: memref<1x64xf32, #tpu.memory_space<vmem>>, %arg3: memref<1x64xf32, #tpu.memory_space<vmem>>, %arg4: memref<64x32xf32, #tpu.memory_space<vmem>>, %arg5: memref<8x32xf32, #tpu.memory_space<vmem>>) attributes {dimension_semantics = [], scalar_prefetch = 0 : i64, scratch_operands = 0 : i64, tpu.core_type = #tpu.core_type<tc>} {
    %c0 = arith.constant 0 : index
    %c0_0 = arith.constant 0 : index
    %0 = vector.load %arg0[%c0, %c0_0] : memref<8x32xf32, #tpu.memory_space<vmem>>, vector<8x32xf32>
    %c0_1 = arith.constant 0 : index
    %c0_2 = arith.constant 0 : index
    %1 = vector.load %arg1[%c0_1, %c0_2] : memref<32x64xf32, #tpu.memory_space<vmem>>, vector<32x64xf32>
    %cst = arith.constant dense<0.000000e+00> : vector<8x64xf32>
    %2 = tpu.matmul %0, %1, %cst {dimension_numbers = #tpu.dot_dimension_numbers<[1], [0], [0], [1], [0, 0, 1, 1], [], []>} : vector<8x32xf32>, vector<32x64xf32>, vector<8x64xf32> -> vector<8x64xf32>
    %cst_3 = arith.constant dense<0.000000e+00> : vector<64xf32>
    %3 = vector.multi_reduction <add>, %2, %cst_3 [0] : vector<8x64xf32> to vector<64xf32>
    %4 = vector.shape_cast %3 : vector<64xf32> to vector<1x64xf32>
    %cst_4 = arith.constant 1.250000e-01 : f32
    %5 = vector.broadcast %cst_4 : f32 to vector<1x64xf32>
    %6 = arith.mulf %4, %5 : vector<1x64xf32>
    %7 = arith.mulf %2, %2 : vector<8x64xf32>
    %cst_5 = arith.constant dense<0.000000e+00> : vector<64xf32>
    %8 = vector.multi_reduction <add>, %7, %cst_5 [0] : vector<8x64xf32> to vector<64xf32>
    %9 = vector.shape_cast %8 : vector<64xf32> to vector<1x64xf32>
    %cst_6 = arith.constant 1.250000e-01 : f32
    %10 = vector.broadcast %cst_6 : f32 to vector<1x64xf32>
    %11 = arith.mulf %9, %10 : vector<1x64xf32>
    %12 = arith.mulf %6, %6 : vector<1x64xf32>
    %13 = arith.subf %11, %12 : vector<1x64xf32>
    %cst_7 = arith.constant 0.000000e+00 : f32
    %14 = vector.broadcast %cst_7 : f32 to vector<1x64xf32>
    %15 = arith.maximumf %13, %14 : vector<1x64xf32>
    %16 = vector.broadcast %6 : vector<1x64xf32> to vector<8x64xf32>
    %17 = arith.subf %2, %16 : vector<8x64xf32>
    %cst_8 = arith.constant 9.99999974E-6 : f32
    %18 = vector.broadcast %cst_8 : f32 to vector<1x64xf32>
    %19 = arith.addf %15, %18 : vector<1x64xf32>
    %20 = math.rsqrt %19 : vector<1x64xf32>
    %21 = vector.broadcast %20 : vector<1x64xf32> to vector<8x64xf32>
    %22 = arith.mulf %17, %21 : vector<8x64xf32>
    %c0_9 = arith.constant 0 : index
    %c0_10 = arith.constant 0 : index
    %23 = vector.load %arg2[%c0_9, %c0_10] : memref<1x64xf32, #tpu.memory_space<vmem>>, vector<1x64xf32>
    %24 = vector.broadcast %23 : vector<1x64xf32> to vector<8x64xf32>
    %25 = arith.mulf %22, %24 : vector<8x64xf32>
    %c0_11 = arith.constant 0 : index
    %c0_12 = arith.constant 0 : index
    %26 = vector.load %arg3[%c0_11, %c0_12] : memref<1x64xf32, #tpu.memory_space<vmem>>, vector<1x64xf32>
    %27 = vector.broadcast %26 : vector<1x64xf32> to vector<8x64xf32>
    %28 = arith.addf %25, %27 : vector<8x64xf32>
    %cst_13 = arith.constant 0.000000e+00 : f32
    %29 = vector.broadcast %cst_13 : f32 to vector<8x64xf32>
    %30 = arith.maximumf %28, %29 : vector<8x64xf32>
    %c0_14 = arith.constant 0 : index
    %c0_15 = arith.constant 0 : index
    %31 = vector.load %arg4[%c0_14, %c0_15] : memref<64x32xf32, #tpu.memory_space<vmem>>, vector<64x32xf32>
    %cst_16 = arith.constant dense<0.000000e+00> : vector<8x32xf32>
    %32 = tpu.matmul %30, %31, %cst_16 {dimension_numbers = #tpu.dot_dimension_numbers<[1], [0], [0], [1], [0, 0, 1, 1], [], []>} : vector<8x64xf32>, vector<64x32xf32>, vector<8x32xf32> -> vector<8x32xf32>
    %c0_17 = arith.constant 0 : index
    %c0_18 = arith.constant 0 : index
    %33 = vector.load %arg5[%c0_17, %c0_18] : memref<8x32xf32, #tpu.memory_space<vmem>>, vector<8x32xf32>
    tpu.vector_store %arg5[%c0_17, %c0_18], %32 {strides = array<i32>} : memref<8x32xf32, #tpu.memory_space<vmem>>, vector<8x32xf32>,
    return
  }
}

</mosaic_0001>

<llo_original>
// kernel: tpu_custom_call.1
$region0: #{tpu_custom_call.1}
  #allocation0 [shape = 'u32[]', space=smem, size = 0x4, offset = 0x4, fixed_abs, tag = 'smem constant byte address 0x4 - core index']
  #allocation1 [shape = 'u32[144,128]{1,0:T(1,128)}', space=vmem, size = 0x12000, scoped, tag = 'internal scratch']
  %s0 = inlined_call_operand.vmem [shape: f32[8,32], index: 0, kind: input, shape index: {}]
  %s1 = inlined_call_operand.vmem [shape: f32[32,64], index: 1, kind: input, shape index: {}]
  %s2 = inlined_call_operand.vmem [shape: f32[1,64], index: 2, kind: input, shape index: {}]
  %s3 = inlined_call_operand.vmem [shape: f32[1,64], index: 3, kind: input, shape index: {}]
  %s4 = inlined_call_operand.vmem [shape: f32[64,32], index: 4, kind: input, shape index: {}]
  %s5 = inlined_call_operand.hbm [shape: f32[8,32], index: 5, kind: output, shape index: {}]
  %s6 = sld [smem:[#allocation0]]
  $region30: #{tpu_custom_call.1} parent=0
    _
  %s8 = ssub.s32 1, %s6
  %s9 = scalar_select 0, %s8, %s6
  $region1: #{tpu_custom_call.1} parent=0
    #allocation2 [shape = 'u8[4096]{0}', space=vmem, size = 0x1000, scoped, tag = 'output window, operand 0, single buffered']
    #allocation3 [shape = 's32[1]{0}', space=sflag, size = 0x4, scoped, tag = 'scoped memory for tpu_custom_call.1']
    %10 = vsyncpa [#allocation3], 0
    // Predicated region
    $region2: #{tpu_custom_call.1} parent=1 // pred_check
      _
    $region3: #{tpu_custom_call.1} parent=1 // pred_check_branch
      %12 = sbr.rel (0) target = $region5
    $region4: #{tpu_custom_call.1} parent=1 // pred_region
      _
    $region5: #{tpu_custom_call.1} parent=1 // pred_fallthru
      _
    // Predicated region
    $region6: #{tpu_custom_call.1} parent=1 // pred_check
      _
    $region7: #{tpu_custom_call.1} parent=1 // pred_check_branch
      %14 = sbr.rel (0) target = $region9
    $region8: #{tpu_custom_call.1} parent=1 // pred_region
      _
    $region9: #{tpu_custom_call.1} parent=1 // pred_fallthru
      _
    // Predicated region
    $region10: #{tpu_custom_call.1} parent=1 // pred_check
      _
    $region11: #{tpu_custom_call.1} parent=1 // pred_check_branch
      %16 = sbr.rel (0) target = $region13
    $region12: #{tpu_custom_call.1} parent=1 // pred_region
      _
    $region13: #{tpu_custom_call.1} parent=1 // pred_fallthru
      _
    // Predicated region
    $region14: #{tpu_custom_call.1} parent=1 // pred_check
      _
    $region15: #{tpu_custom_call.1} parent=1 // pred_check_branch
      %18 = sbr.rel (0) target = $region17
    $region16: #{tpu_custom_call.1} parent=1 // pred_region
      _
    $region17: #{tpu_custom_call.1} parent=1 // pred_fallthru
      _
    // Predicated region
    $region18: #{tpu_custom_call.1} parent=1 // pred_check
      _
    $region19: #{tpu_custom_call.1} parent=1 // pred_check_branch
      %20 = sbr.rel (0) target = $region21
    $region20: #{tpu_custom_call.1} parent=1 // pred_region
      _
    $region21: #{tpu_custom_call.1} parent=1 // pred_fallthru
      _
    %v21 = vld [vmem:[%s0] sm:$0xff]
    %v22 = vld [vmem:[%s1] sm:$0xff]
    %v23 = vld [vmem:[%s1 + $0x8] sm:$0xff]
    %v24 = vld [vmem:[%s1 + $0x10] sm:$0xff]
    %v25 = vld [vmem:[%s1 + $0x18] sm:$0xff]
    %vm26 = vcmask 261120
    %v28 = vsel %vm26, %v21, 0
    %30 = vmatprep.subr.mxu0 0.0
    %31 = vmatpush1.msra.mxu0 0.0
    %32 = vmatprep.subr.mxu0 0.0
    %33 = vmatpush1.msra.mxu0 0.0
    %34 = vmatprep.subr.mxu0 0.0
    %35 = vmatpush1.msra.mxu0 0.0
    %36 = vmatprep.subr.mxu0 0.0
    %37 = vmatpush1.msra.mxu0 0.0
    %38 = vmatprep.subr.mxu0 0.0
    %39 = vmatpush1.msra.mxu0 0.0
    %40 = vmatprep.subr.mxu0 0.0
    %41 = vmatpush1.msra.mxu0 0.0
    %42 = vmatprep.subr.mxu0 0.0
    %43 = vmatpush1.msra.mxu0 0.0
    %44 = vmatprep.subr.mxu0 0.0
    %45 = vmatpush1.msra.mxu0 0.0
    %46 = vmatprep.subr.mxu0 0.0
    %47 = vmatpush1.msra.mxu0 0.0
    %48 = vmatprep.subr.mxu0 0.0
    %49 = vmatpush1.msra.mxu0 0.0
    %50 = vmatprep.subr.mxu0 0.0
    %51 = vmatpush1.msra.mxu0 0.0
    %52 = vmatprep.subr.mxu0 0.0
    %53 = vmatpush1.msra.mxu0 0.0
    %54 = vmatprep.subr.mxu0 0.0
    %55 = vmatpush1.msra.mxu0 %v25
    %56 = vmatprep.subr.mxu0 0.0
    %57 = vmatpush1.msra.mxu0 %v24
    %58 = vmatprep.subr.mxu0 0.0
    %59 = vmatpush1.msra.mxu0 %v23
    %60 = vmatprep.subr.mxu0 0.0
    %61 = vmatpush1.msra.mxu0 %v22
    %62 = vmatprep.subr.mxu0 0.0
    %63 = vmatpush2.msra.mxu0 0.0
    %64 = vmatprep.subr.mxu0 0.0
    %65 = vmatpush2.msra.mxu0 0.0
    %66 = vmatprep.subr.mxu0 0.0
    %67 = vmatpush2.msra.mxu0 0.0
    %68 = vmatprep.subr.mxu0 0.0
    %69 = vmatpush2.msra.mxu0 0.0
    %70 = vmatprep.subr.mxu0 0.0
    %71 = vmatpush2.msra.mxu0 0.0
    %72 = vmatprep.subr.mxu0 0.0
    %73 = vmatpush2.msra.mxu0 0.0
    %74 = vmatprep.subr.mxu0 0.0
    %75 = vmatpush2.msra.mxu0 0.0
    %76 = vmatprep.subr.mxu0 0.0
    %77 = vmatpush2.msra.mxu0 0.0
    %78 = vmatprep.subr.mxu0 0.0
    %79 = vmatpush2.msra.mxu0 0.0
    %80 = vmatprep.subr.mxu0 0.0
    %81 = vmatpush2.msra.mxu0 0.0
    %82 = vmatprep.subr.mxu0 0.0
    %83 = vmatpush2.msra.mxu0 0.0
    %84 = vmatprep.subr.mxu0 0.0
    %85 = vmatpush2.msra.mxu0 0.0
    %86 = vmatprep.subr.mxu0 0.0
    %87 = vmatpush2.msra.mxu0 0.0
    %88 = vmatprep.subr.mxu0 0.0
    %89 = vmatpush2.msra.mxu0 0.0
    %90 = vmatprep.subr.mxu0 0.0
    %91 = vmatpush2.msra.mxu0 0.0
    %92 = vmatprep.subr.mxu0 0.0
    %93 = vmatpush2.msra.mxu0 0.0
    %94 = vmatprep.mubr.f32.mxu0 0.0
    %95 = vmatmul.mubr.f32.gmra.mxu0 %v28
    %v96 = vpop.f32.mrf.mxu0
    %v97 = vadd.f32 0.0, %v96
    %v98 = vpop.f32.mrf.mxu0
    %99 = vdwg.mxu0
    %vm100 = vcmask 523264
    %v101 = vsel %vm100, %v97, 0.0
    %v102 = vrot.slane %v101, 4
    %v103 = vadd.f32 %v101, %v102
    %v104 = vrot.slane %v103, 2
    %v105 = vadd.f32 %v103, %v104
    %v106 = vrot.slane %v105, 1
    %v107 = vadd.f32 %v105, %v106
    %v108 = vmul.f32 %v107, 0.125
    %v109 = vmul.f32 %v97, %v97
    %v110 = vsel %vm100, %v109, 0.0
    %v111 = vrot.slane %v110, 4
    %v112 = vadd.f32 %v110, %v111
    %v113 = vrot.slane %v112, 2
    %v114 = vadd.f32 %v112, %v113
    %v115 = vrot.slane %v114, 1
    %v116 = vadd.f32 %v114, %v115
    %v117 = vmul.f32 %v116, 0.125
    %v118 = vmul.f32 %v108, %v108
    %v119 = vsub.f32 %v117, %v118
    %v120 = vmax.f32 %v119, 0.0
    %v121 = vsub.f32 %v97, %v108
    %v122 = vadd.f32 %v120, 1e-05
    %v123 = vrsqrt.pop %v122
    %v124 = vmul.f32 %v121, %v123
    %v125 = vld [vmem:[%s2] sm:$0x1]
    %v127 = vlaneseq
    %v128 = vshrl.u32 %v127, 7
    %v129 = vsub.s32 0, %v128
    %v130 = vrot.slane %v125, %v129
    %v132 = vmul.f32 %v124, %v130
    %v133 = vld [vmem:[%s3] sm:$0x1]
    %v135 = vlaneseq
    %v136 = vshrl.u32 %v135, 7
    %v137 = vsub.s32 0, %v136
    %v138 = vrot.slane %v133, %v137
    %v140 = vadd.f32 %v132, %v138
    %v141 = vmax.f32 %v140, 0.0
    %v142 = vld [vmem:[%s4] sm:$0xff]
    %v143 = vld [vmem:[%s4 + $0x8] sm:$0xff]
    %v144 = vld [vmem:[%s4 + $0x10] sm:$0xff]
    %v145 = vld [vmem:[%s4 + $0x18] sm:$0xff]
    %v146 = vld [vmem:[%s4 + $0x20] sm:$0xff]
    %v147 = vld [vmem:[%s4 + $0x28] sm:$0xff]
    %v148 = vld [vmem:[%s4 + $0x30] sm:$0xff]
    %v149 = vld [vmem:[%s4 + $0x38] sm:$0xff]
    %v151 = vsel %vm100, %v141, 0
    %153 = vmatprep.subr.mxu0 0.0
    %154 = vmatpush1.msra.mxu0 0.0
    %155 = vmatprep.subr.mxu0 0.0
    %156 = vmatpush1.msra.mxu0 0.0
    %157 = vmatprep.subr.mxu0 0.0
    %158 = vmatpush1.msra.mxu0 0.0
    %159 = vmatprep.subr.mxu0 0.0
    %160 = vmatpush1.msra.mxu0 0.0
    %161 = vmatprep.subr.mxu0 0.0
    %162 = vmatpush1.msra.mxu0 0.0
    %163 = vmatprep.subr.mxu0 0.0
    %164 = vmatpush1.msra.mxu0 0.0
    %165 = vmatprep.subr.mxu0 0.0
    %166 = vmatpush1.msra.mxu0 0.0
    %167 = vmatprep.subr.mxu0 0.0
    %168 = vmatpush1.msra.mxu0 0.0
    %169 = vmatprep.subr.mxu0 0.0
    %170 = vmatpush1.msra.mxu0 %v149
    %171 = vmatprep.subr.mxu0 0.0
    %172 = vmatpush1.msra.mxu0 %v148
    %173 = vmatprep.subr.mxu0 0.0
    %174 = vmatpush1.msra.mxu0 %v147
    %175 = vmatprep.subr.mxu0 0.0
    %176 = vmatpush1.msra.mxu0 %v146
    %177 = vmatprep.subr.mxu0 0.0
    %178 = vmatpush1.msra.mxu0 %v145
    %179 = vmatprep.subr.mxu0 0.0
    %180 = vmatpush1.msra.mxu0 %v144
    %181 = vmatprep.subr.mxu0 0.0
    %182 = vmatpush1.msra.mxu0 %v143
    %183 = vmatprep.subr.mxu0 0.0
    %184 = vmatpush1.msra.mxu0 %v142
    %185 = vmatprep.subr.mxu0 0.0
    %186 = vmatpush2.msra.mxu0 0.0
    %187 = vmatprep.subr.mxu0 0.0
    %188 = vmatpush2.msra.mxu0 0.0
    %189 = vmatprep.subr.mxu0 0.0
    %190 = vmatpush2.msra.mxu0 0.0
    %191 = vmatprep.subr.mxu0 0.0
    %192 = vmatpush2.msra.mxu0 0.0
    %193 = vmatprep.subr.mxu0 0.0
    %194 = vmatpush2.msra.mxu0 0.0
    %195 = vmatprep.subr.mxu0 0.0
    %196 = vmatpush2.msra.mxu0 0.0
    %197 = vmatprep.subr.mxu0 0.0
    %198 = vmatpush2.msra.mxu0 0.0
    %199 = vmatprep.subr.mxu0 0.0
    %200 = vmatpush2.msra.mxu0 0.0
    %201 = vmatprep.subr.mxu0 0.0
    %202 = vmatpush2.msra.mxu0 0.0
    %203 = vmatprep.subr.mxu0 0.0
    %204 = vmatpush2.msra.mxu0 0.0
    %205 = vmatprep.subr.mxu0 0.0
    %206 = vmatpush2.msra.mxu0 0.0
    %207 = vmatprep.subr.mxu0 0.0
    %208 = vmatpush2.msra.mxu0 0.0
    %209 = vmatprep.subr.mxu0 0.0
    %210 = vmatpush2.msra.mxu0 0.0
    %211 = vmatprep.subr.mxu0 0.0
    %212 = vmatpush2.msra.mxu0 0.0
    %213 = vmatprep.subr.mxu0 0.0
    %214 = vmatpush2.msra.mxu0 0.0
    %215 = vmatprep.subr.mxu0 0.0
    %216 = vmatpush2.msra.mxu0 0.0
    %217 = vmatprep.mubr.f32.mxu0 0.0
    %218 = vmatmul.mubr.f32.gmra.mxu0 %v151
    %v219 = vpop.f32.mrf.mxu0
    %v220 = vadd.f32 0.0, %v219
    %v221 = vpop.f32.mrf.mxu0
    %222 = vdwg.mxu0
    %223 = vst.msk [vmem:[#allocation2] sm:$0xff] %vm26, %v220
    // Predicated region
    $region22: #{tpu_custom_call.1} parent=1 // pred_check
      _
    $region23: #{tpu_custom_call.1} parent=1 // pred_check_branch
      %225 = sbr.rel (0) target = $region25
    $region24: #{tpu_custom_call.1} parent=1 // pred_region
      %s227 = ssub.s32 128, 128
      %228 = vsyncadd [#allocation3], %s227
      %s230 = sshll.u32 [#allocation2], 4
      %s231 = int_to_ptr.vmem [resolvable:$true] %s230
      %233 = dma.vmem_to_hbm [thread:$0]  %s231, 128, %s5, [#allocation3]
    $region25: #{tpu_custom_call.1} parent=1 // pred_fallthru
      _
    // Predicated region
    $region26: #{tpu_custom_call.1} parent=1 // pred_check
      _
    $region27: #{tpu_custom_call.1} parent=1 // pred_check_branch
      %235 = sbr.rel (0) target = $region29
    $region28: #{tpu_custom_call.1} parent=1 // pred_region
      %236 = dma.done [#allocation3], 128
    $region29: #{tpu_custom_call.1} parent=1 // pred_fallthru
      _
    %237 = vsyncpa [#allocation3], 1

</llo_original>
